<compile_context>
chip_gen: v6e
topology: v6e:2x2x1
jax: 0.10.0
libtpu: 0.0.40
codegen_flags: <defaults>
</compile_context>

<pallas_src>
import jax
import jax.numpy as jnp
from jax.experimental import pallas as pl
from jax.experimental.pallas import tpu as pltpu


# ------------------------------------------------------------------ helpers
def _round_up(v, m):
    return (v + m - 1) // m * m


def _vmem_capacity_bytes():
    try:
        return int(pltpu.get_tpu_info().vmem_capacity_bytes)
    except Exception:
        return 64 << 20     # most conservative (v7x per-TensorCore)


def _pick_tile_rows(n_nodes, k_cols, f_pad, budget_bytes):
    """Largest row tile whose (double-buffered) per-step blocks + resident g fit."""
    resident = 2 * (_round_up(k_cols, 16) * f_pad * 2 + 8 * f_pad * 4)  # g_stack + bias
    for t in (n_nodes, 1024, 512, 256, 128, 64, 32, 16, 8):
        if t > n_nodes or n_nodes % t or (t != n_nodes and t % 8):
            continue
        per_step = 2 * (t * _round_up(k_cols, 128) * 2     # A tile   (bf16)
                        + t * f_pad * 2                     # g_self   (bf16)
                        + t * f_pad * 4)                    # out tile (f32)
        if resident + per_step <= budget_bytes:
            return t
    return min(n_nodes, 8)


# ------------------------------------------------------------------ kernels
def _proj_kernel(x_ref, w_ref, g_ref):
    """One grid step = one projection: step e<E -> x @ P_e, step E -> x @ mean_e(Ws_e)."""
    g_ref[0] = jnp.dot(x_ref[...], w_ref[0],
                       preferred_element_type=jnp.float32).astype(g_ref.dtype)


def _agg_kernel(gself_ref, a_ref, gstack_ref, bias_ref, o_ref):
    """One grid step = one tile of output node rows.

    out = bias + (x @ mean_e Ws_e) + sum_e (A_norm_e / E) @ (x @ P_e)
        = bias + g_self + A_stack @ g_stack              (single long-K MXU matmul)
    """
    agg = jnp.dot(a_ref[...], gstack_ref[...], preferred_element_type=jnp.float32)
    o_ref[...] = agg + gself_ref[...].astype(jnp.float32) + bias_ref[...]


# ------------------------------------------------------------------ weight folding
def _fold_weights(w_neigh, b_neigh, w_self, w_agg, b_out, f_pad):
    """Fold the per-etype SageConv weights.

    Returns:
      w_all (E+1, Fin, Fpad) bf16 : w_all[e] = Wn_e @ Wg_e,  w_all[E] = mean_e Ws_e
      bias  (1, Fpad)        f32  : mean_e(b_e) + mean_e(bn_e @ Wg_e)
    """
    f_out = w_self.shape[2]
    p = jnp.einsum('eih,eho->eio', w_neigh, w_agg)                  # P_e = Wn_e @ Wg_e
    q = jnp.einsum('ei,eio->eo', b_neigh[:, 0, :], w_agg)           # bn_e @ Wg_e
    w_all = jnp.concatenate([p, w_self.mean(axis=0, keepdims=True)], axis=0)
    w_all = jnp.pad(w_all, ((0, 0), (0, 0), (0, f_pad - f_out)))
    bias = (b_out[:, 0, :].mean(axis=0) + q.mean(axis=0))[None, :]
    bias = jnp.pad(bias, ((0, 0), (0, f_pad - f_out)))
    return w_all.astype(jnp.bfloat16), bias.astype(jnp.float32)


# ------------------------------------------------------------------ pallas wrappers
def _project(x_bf, w_all, *, vmem_limit):
    n_ep1, f_in, f_pad = w_all.shape
    n_nodes = x_bf.shape[0]
    return pl.pallas_call(
        _proj_kernel,
        out_shape=jax.ShapeDtypeStruct((n_ep1, n_nodes, f_pad), jnp.bfloat16),
        grid_spec=pltpu.PrefetchScalarGridSpec(
            num_scalar_prefetch=0,
            grid=(n_ep1,),
            in_specs=[
                pl.BlockSpec((n_nodes, f_in), lambda e: (0, 0)),        # x (resident)
                pl.BlockSpec((1, f_in, f_pad), lambda e: (e, 0, 0)),    # one folded weight
            ],
            out_specs=pl.BlockSpec((1, n_nodes, f_pad), lambda e: (e, 0, 0)),
        ),
        compiler_params=pltpu.CompilerParams(
            dimension_semantics=("parallel",),
            vmem_limit_bytes=vmem_limit),
    )(x_bf, w_all)


def _aggregate(g_self, a_stack, g_stack, bias, *, tile_rows, vmem_limit):
    n_nodes, f_pad = g_self.shape
    k_cols = a_stack.shape[1]
    num_tiles = n_nodes // tile_rows
    return pl.pallas_call(
        _agg_kernel,
        out_shape=jax.ShapeDtypeStruct((n_nodes, f_pad), jnp.float32),
        grid_spec=pltpu.PrefetchScalarGridSpec(
            num_scalar_prefetch=0,
            grid=(num_tiles,),
            in_specs=[
                pl.BlockSpec((tile_rows, f_pad), lambda i: (i, 0)),     # g_self tile (bf16)
                pl.BlockSpec((tile_rows, k_cols), lambda i: (i, 0)),    # A tile (only advancing stream)
                pl.BlockSpec((k_cols, f_pad), lambda i: (0, 0)),        # g_stack (resident, bf16)
                pl.BlockSpec((1, f_pad), lambda i: (0, 0)),             # bias (resident, f32)
            ],
            out_specs=pl.BlockSpec((tile_rows, f_pad), lambda i: (i, 0)),
        ),
        compiler_params=pltpu.CompilerParams(
            dimension_semantics=("parallel",),
            vmem_limit_bytes=vmem_limit),
    )(g_self, a_stack, g_stack, bias)


def hetero_sage_conv(x, a_stack, w_neigh, b_neigh, w_self, w_agg, b_out, *,
                     tile_rows=None):
    """x: (N, Fin) f32; a_stack: (N, E*N) bf16 pre-normalized adjacency (1/E edge-type
    mean and zero-in-degree identity fallback folded in); weights as in the module.
    Returns (N, Fout) f32."""
    n_nodes, f_in = x.shape
    n_etypes = w_neigh.shape[0]
    f_out = w_self.shape[2]
    f_pad = _round_up(f_out, 128)          # lane-dense g / out blocks (unmasked stores)
    k_cols = n_etypes * n_nodes
    assert a_stack.shape == (n_nodes, k_cols)

    vmem_cap = _vmem_capacity_bytes()
    if tile_rows is None:
        tile_rows = _pick_tile_rows(n_nodes, k_cols, f_pad, int(0.70 * vmem_cap))
    assert n_nodes % tile_rows == 0, "node count must be a multiple of the row tile"

    w_all, bias = _fold_weights(w_neigh, b_neigh, w_self, w_agg, b_out, f_pad)
    x_bf = x.astype(jnp.bfloat16)

    # Scoped-VMEM estimates (raise the 16/32 MiB default, cap below physical VMEM).
    proj_est = 2 * (_round_up(n_nodes, 16) * _round_up(f_in, 128) * 2
                    + _round_up(f_in, 16) * f_pad * 2
                    + _round_up(n_nodes, 16) * f_pad * 2)
    agg_est = 2 * (tile_rows * f_pad * 2
                   + tile_rows * _round_up(k_cols, 128) * 2
                   + _round_up(k_cols, 16) * f_pad * 2
                   + 8 * f_pad * 4
                   + tile_rows * f_pad * 4)

    def _limit(est):
        return int(min(int(0.85 * vmem_cap), max(32 << 20, 2 * est)))

    # 1) Hoisted projection: computed exactly once (not per row tile).
    g_all = _project(x_bf, w_all, vmem_limit=_limit(proj_est))      # (E+1, N, Fpad) bf16
    g_stack = g_all[:n_etypes].reshape(k_cols, f_pad)               # (E*N, Fpad) bf16
    g_self = g_all[n_etypes]                                        # (N, Fpad)   bf16

    # 2) Aggregation: one stacked matmul per row tile.
    out = _aggregate(g_self, a_stack, g_stack, bias,
                     tile_rows=tile_rows, vmem_limit=_limit(agg_est))
    return out[:, :f_out]


# ------------------------------------------------------------------ graph operands
def build_graph_operands(edge_index, edge_type, etype_values, n_nodes):
    """Dense, pre-normalized adjacency operands.

    a_norm[e, t, s]   : 1/max(deg_e(t),1) edge counts (row sums exactly 1), with an
                        identity row for zero-in-degree nodes (models
                        scatter(..., out=h.clone(), reduce='mean') fallback).  f32.
    a_stack[t, e*N+s] : a_norm[e, t, s] / E (edge-type mean folded in), cast to bf16
                        (~0.4% relative quantization on the aggregation term).
    """
    src, dst = edge_index[0], edge_index[1]
    n_etypes = len(etype_values)
    eye = jnp.eye(n_nodes, dtype=jnp.float32)
    a_list = []
    for ev in etype_values:
        m = (edge_type == ev).astype(jnp.float32)
        counts = jnp.zeros((n_nodes, n_nodes), jnp.float32).at[dst, src].add(m)
        deg = counts.sum(axis=1, keepdims=True)
        counts = counts + jnp.where(deg > 0, 0.0, 1.0) * eye        # zero-in-degree fallback
        a_list.append(counts / jnp.maximum(deg, 1.0))
    a_norm = jnp.stack(a_list)                                      # (E, N, N) f32
    a_stack = jnp.concatenate(list(a_norm / n_etypes), axis=1)      # (N, E*N)
    return a_norm, a_stack.astype(jnp.bfloat16)


def xavier_uniform(key, shape, gain):
    fan_in, fan_out = shape[-2], shape[-1]
    bound = gain * jnp.sqrt(6.0 / (fan_in + fan_out))
    return jax.random.uniform(key, shape, jnp.float32, -bound, bound)


# ------------------------------------------------------------------ references
def reference_module(x, a_norm, w_neigh, b_neigh, w_self, w_agg, b_out):
    """Module-faithful f32 reference: per-etype SageConv (mean aggregation with
    zero-in-degree identity fallback), mean over edge types."""
    outs = []
    for e in range(a_norm.shape[0]):
        h = x @ w_neigh[e] + b_neigh[e]
        agg = a_norm[e] @ h
        outs.append(x @ w_self[e] + agg @ w_agg[e] + b_out[e])
    return jnp.stack(outs).mean(axis=0)


def reference_kernel_math(x, a_stack, w_neigh, b_neigh, w_self, w_agg, b_out):
    """Mirrors the kernel's folded bf16-in / f32-acc math (tight check)."""
    n_etypes = w_neigh.shape[0]
    f_out = w_self.shape[2]
    f_pad = _round_up(f_out, 128)
    w_all, bias = _fold_weights(w_neigh, b_neigh, w_self, w_agg, b_out, f_pad)
    xb = x.astype(jnp.bfloat16).astype(jnp.float32)
    wb = w_all.astype(jnp.float32)
    g = jnp.einsum('nf,efo->eno', xb, wb).astype(jnp.bfloat16)      # (E+1, N, Fpad)
    g_stack = g[:n_etypes].reshape(-1, f_pad).astype(jnp.float32)
    g_self = g[n_etypes].astype(jnp.float32)
    out = bias + g_self + a_stack.astype(jnp.float32) @ g_stack
    return out[:, :f_out]


# ------------------------------------------------------------------ main
if __name__ == "__main__":
    key = jax.random.PRNGKey(0)
    n_nodes, f_in, f_out = 256, 32, 32
    etypes = {"onset": 0, "consecutive": 1, "rest": 2}
    n_etypes = len(etypes)
    n_edges = 1024

    keys = jax.random.split(key, 8)
    x = jax.random.normal(keys[0], (n_nodes, f_in), jnp.float32)
    edge_index = jax.random.randint(keys[1], (2, n_edges), 0, n_nodes, jnp.int32)
    edge_type = jax.random.randint(keys[2], (n_edges,), 0, n_etypes, jnp.int32)

    gain = jnp.sqrt(2.0)                     # nn.init.calculate_gain('relu')
    w_neigh = xavier_uniform(keys[3], (n_etypes, f_in, f_in), gain)
    w_self = xavier_uniform(keys[4], (n_etypes, f_in, f_out), gain)
    w_agg = xavier_uniform(keys[5], (n_etypes, f_in, f_out), gain)
    b_neigh = 0.1 * jax.random.normal(keys[6], (n_etypes, 1, f_in), jnp.float32)
    b_out = 0.1 * jax.random.normal(keys[7], (n_etypes, 1, f_out), jnp.float32)

    a_norm, a_stack = build_graph_operands(edge_index, edge_type,
                                           list(etypes.values()), n_nodes)

    # tile_rows=128 -> 2 "parallel" grid steps (exercises the row-tiled pipeline);
    # pass tile_rows=None to auto-derive from the device VMEM budget.
    out = hetero_sage_conv(x, a_stack, w_neigh, b_neigh, w_self, w_agg, b_out,
                           tile_rows=128)
    out = jax.block_until_ready(out)
    assert out.shape == (n_nodes, f_out)

    # Tight check: identical folding / identical bf16 quantization as the kernels.
    ref_q = reference_kernel_math(x, a_stack, w_neigh, b_neigh, w_self, w_agg, b_out)
    assert jnp.allclose(out, ref_q, atol=2e-2, rtol=2e-2), (
        f"kernel mismatch vs quantization-matched reference: "
        f"max abs diff {jnp.max(jnp.abs(out - ref_q))}")

    # Loose sanity check vs full-f32 module semantics (bf16 x/W/g/A quantization).
    ref_f = reference_module(x, a_norm, w_neigh, b_neigh, w_self, w_agg, b_out)
    assert jnp.allclose(out, ref_f, atol=0.3, rtol=0.1), (
        f"kernel deviates too far from f32 reference: "
        f"max abs diff {jnp.max(jnp.abs(out - ref_f))}")

    print("KERNEL_OK")
</pallas_src>

<mosaic_0001>
module attributes {stable_mosaic.version = 11 : i64} {
  func.func @_proj_kernel(%arg0: i32, %arg1: memref<256x32xbf16, #tpu.memory_space<vmem>>, %arg2: memref<1x32x128xbf16, #tpu.memory_space<vmem>>, %arg3: memref<1x256x128xbf16, #tpu.memory_space<vmem>>) attributes {dimension_semantics = [#tpu.dimension_semantics<parallel>], iteration_bounds = array<i64: 4>, scalar_prefetch = 0 : i64, scratch_operands = 0 : i64, tpu.core_type = #tpu.core_type<tc>, window_params = [{pipeline_mode = #tpu.pipeline_mode<synchronous>, transform_indices = @transform_0, window_bounds = array<i64: 256, 32>}, {transform_indices = @transform_1, window_bounds = array<i64: 1, 32, 128>}, {transform_indices = @transform_2, window_bounds = array<i64: 1, 256, 128>}]} {
    %c0 = arith.constant 0 : index
    %c0_0 = arith.constant 0 : index
    %0 = vector.load %arg1[%c0, %c0_0] : memref<256x32xbf16, #tpu.memory_space<vmem>>, vector<256x32xbf16>
    %c0_1 = arith.constant 0 : index
    %c0_2 = arith.constant 0 : index
    %c0_3 = arith.constant 0 : index
    %1 = vector.load %arg2[%c0_1, %c0_2, %c0_3] : memref<1x32x128xbf16, #tpu.memory_space<vmem>>, vector<1x32x128xbf16>
    %2 = vector.shape_cast %1 : vector<1x32x128xbf16> to vector<32x128xbf16>
    %cst = arith.constant dense<0.000000e+00> : vector<256x128xf32>
    %3 = tpu.matmul %0, %2, %cst {dimension_numbers = #tpu.dot_dimension_numbers<[1], [0], [0], [1], [0, 0, 1, 1], [], []>} : vector<256x32xbf16>, vector<32x128xbf16>, vector<256x128xf32> -> vector<256x128xf32>
    %4 = arith.truncf %3 : vector<256x128xf32> to vector<256x128xbf16>
    %c0_4 = arith.constant 0 : index
    %c0_5 = arith.constant 0 : index
    %c0_6 = arith.constant 0 : index
    %5 = vector.load %arg3[%c0_4, %c0_5, %c0_6] : memref<1x256x128xbf16, #tpu.memory_space<vmem>>, vector<1x256x128xbf16>
    %6 = vector.shape_cast %5 : vector<1x256x128xbf16> to vector<256x128xbf16>
    %7 = vector.shape_cast %4 : vector<256x128xbf16> to vector<1x256x128xbf16>
    tpu.vector_store %arg3[%c0_4, %c0_5, %c0_6], %7 {strides = array<i32>} : memref<1x256x128xbf16, #tpu.memory_space<vmem>>, vector<1x256x128xbf16>,
    return
  }
  func.func @transform_0(%arg0: i32) -> (i32, i32) {
    %c0_i32 = arith.constant 0 : i32
    %c0_i32_0 = arith.constant 0 : i32
    %c0_i32_1 = arith.constant 0 : i32
    return %c0_i32, %c0_i32_0 : i32, i32
  }
  func.func @transform_1(%arg0: i32) -> (i32, i32, i32) {
    %c0_i32 = arith.constant 0 : i32
    %c0_i32_0 = arith.constant 0 : i32
    %c0_i32_1 = arith.constant 0 : i32
    return %arg0, %c0_i32, %c0_i32_0 : i32, i32, i32
  }
  func.func @transform_2(%arg0: i32) -> (i32, i32, i32) {
    %c0_i32 = arith.constant 0 : i32
    %c0_i32_0 = arith.constant 0 : i32
    %c0_i32_1 = arith.constant 0 : i32
    return %arg0, %c0_i32, %c0_i32_0 : i32, i32, i32
  }
}

</mosaic_0001>

<llo_original>
// kernel: tpu_custom_call.1
$region0: #{tpu_custom_call.1}
  #allocation0 [shape = 'u32[]', space=smem, size = 0x4, offset = 0x4, fixed_abs, tag = 'smem constant byte address 0x4 - core index']
  #allocation1 [shape = 'u32[144,128]{1,0:T(1,128)}', space=vmem, size = 0x12000, scoped, tag = 'internal scratch']
  %s0 = inlined_call_operand.vmem [shape: bf16[256,32], index: 0, kind: input, shape index: {}]
  %s1 = inlined_call_operand.vmem [shape: bf16[4,32,128], index: 1, kind: input, shape index: {}]
  %s2 = inlined_call_operand.hbm [shape: bf16[4,256,128], index: 2, kind: output, shape index: {}]
  %s3 = sld [smem:[#allocation0]]
  $region41: #{tpu_custom_call.1} parent=0
    _
  %s5 = ssub.s32 1, %s3
  %s6 = scalar_select 0, %s5, %s3
  $region1: #{tpu_custom_call.1} parent=0
    #allocation2 [shape = 'u8[131072]{0}', space=vmem, size = 0x20000, scoped, tag = 'output window, operand 0']
    #allocation3 [shape = 's32[2]{0}', space=sflag, size = 0x8, scoped, tag = 'scoped memory for tpu_custom_call.1']
    %7 = vsyncpa [#allocation3], 0
    %s8 = scalar_lea.sflag [#allocation3], 1
    %9 = vsyncpa %s8, 0
    loop: start=0, step=1, limit=6
    $region2: #{tpu_custom_call.1} parent=1 // loop_pre_header
      _
    $region3: #{tpu_custom_call.1} parent=1 // loop_header
      %s11 = sphi 0, %s15
      %p12 = scmp.ge.s32.totalorder %s11, 6
      %s19 = sphi 0, %s19
      %s21 = sphi 0, %s19
      %s22 = sphi 0, %s21
      %s36 = sphi 0, %s22
      %s42 = sphi 0, %s44
      %s45 = sphi 0, %s42
      %s46 = sphi 0, %s45
      %s62 = sphi 0, %s46
      %s68 = sphi 0, %s70
      %s71 = sphi 0, %s68
      %s72 = sphi 0, %s71
      %s88 = sphi 0, %s72
    $region4: #{tpu_custom_call.1} parent=1 // loop_header_branch
      %14 = sbr.rel (%p12) target = $region8
    $region5: #{tpu_custom_call.1} parent=1 // loop_body
      %s16 = ssub.s32 %s11, 1
      %s17 = ssub.s32 %s11, 2
      %s18 = sadd.s32 %s11, 1
      %s20 = sadd.s32 %s19, 1
      %p23 = scmp.eq.s32.totalorder %s11, 3
      %p24 = scmp.ne.s32.totalorder %s19, %s21
      %p25 = scmp.eq.s32.totalorder %s11, 0
      %p26 = por %p24, %p25
      %p27 = scmp.ne.s32.totalorder %s19, %s21
      %p28 = scmp.eq.s32.totalorder %s16, 3
      %p29 = por %p27, %p28
      %p30 = scmp.ne.s32.totalorder %s21, %s22
      %p31 = scmp.eq.s32.totalorder %s16, 0
      %p32 = por %p30, %p31
      %p33 = scmp.ne.s32.totalorder %s21, %s22
      %p34 = scmp.eq.s32.totalorder %s17, 3
      %p35 = por %p33, %p34
      %p37 = scmp.ne.s32.totalorder %s22, %s36
      %p38 = scmp.eq.s32.totalorder %s17, 0
      %p39 = por %p37, %p38
      %s40 = ssub.s32 %s11, %s18
      %p41 = scmp.eq.s32.totalorder %s40, 0
      %s43 = sadd.s32 %s42, 1
      %s44 = scalar_select %p41, %s42, %s43
      %p47 = pneg %p41
      %p48 = scmp.eq.s32.totalorder %s11, 3
      %p49 = por %p47, %p48
      %p50 = scmp.ne.s32.totalorder %s42, %s45
      %p51 = scmp.eq.s32.totalorder %s11, 0
      %p52 = por %p50, %p51
      %p53 = scmp.ne.s32.totalorder %s42, %s45
      %p54 = scmp.eq.s32.totalorder %s16, 3
      %p55 = por %p53, %p54
      %p56 = scmp.ne.s32.totalorder %s45, %s46
      %p57 = scmp.eq.s32.totalorder %s16, 0
      %p58 = por %p56, %p57
      %p59 = scmp.ne.s32.totalorder %s45, %s46
      %p60 = scmp.eq.s32.totalorder %s17, 3
      %p61 = por %p59, %p60
      %p63 = scmp.ne.s32.totalorder %s46, %s62
      %p64 = scmp.eq.s32.totalorder %s17, 0
      %p65 = por %p63, %p64
      %s66 = ssub.s32 %s11, %s18
      %p67 = scmp.eq.s32.totalorder %s66, 0
      %s69 = sadd.s32 %s68, 1
      %s70 = scalar_select %p67, %s68, %s69
      %p73 = pneg %p67
      %p74 = scmp.eq.s32.totalorder %s11, 3
      %p75 = por %p73, %p74
      %p76 = scmp.ne.s32.totalorder %s68, %s71
      %p77 = scmp.eq.s32.totalorder %s11, 0
      %p78 = por %p76, %p77
      %p79 = scmp.ne.s32.totalorder %s68, %s71
      %p80 = scmp.eq.s32.totalorder %s16, 3
      %p81 = por %p79, %p80
      %p82 = scmp.ne.s32.totalorder %s71, %s72
      %p83 = scmp.eq.s32.totalorder %s16, 0
      %p84 = por %p82, %p83
      %p85 = scmp.ne.s32.totalorder %s71, %s72
      %p86 = scmp.eq.s32.totalorder %s17, 3
      %p87 = por %p85, %p86
      %p89 = scmp.ne.s32.totalorder %s72, %s88
      %p90 = scmp.eq.s32.totalorder %s17, 0
      %p91 = por %p89, %p90
      %p92 = scmp.le.s32.totalorder 1, %s11
      %p93 = scmp.lt.s32.totalorder %s11, 5
      %p94 = pnand %p92, %p93
      %p95 = pneg %p94
      // Predicated region
      $region9: #{tpu_custom_call.1} parent=5 // pred_check
        _
      $region10: #{tpu_custom_call.1} parent=5 // pred_check_branch
        %97 = sbr.rel (%p94) target = $region12
      $region11: #{tpu_custom_call.1} parent=5 // pred_region
        %s98 = ssub.s32 %s11, 1
        // Predicated region
        $region13: #{tpu_custom_call.1} parent=11 // pred_check
          %p99 = pneg %p32
        $region14: #{tpu_custom_call.1} parent=11 // pred_check_branch
          %101 = sbr.rel (%p99) target = $region16
        $region15: #{tpu_custom_call.1} parent=11 // pred_region
          _
        $region16: #{tpu_custom_call.1} parent=11 // pred_fallthru
          _
      $region12: #{tpu_custom_call.1} parent=5 // pred_fallthru
        _
      %p102 = scmp.lt.s32.totalorder %s11, 4
      // Predicated region
      $region17: #{tpu_custom_call.1} parent=5 // pred_check
        %p103 = pneg %p102
      $region18: #{tpu_custom_call.1} parent=5 // pred_check_branch
        %105 = sbr.rel (%p103) target = $region20
      $region19: #{tpu_custom_call.1} parent=5 // pred_region
        // Predicated region
        $region21: #{tpu_custom_call.1} parent=19 // pred_check
          %p106 = pneg %p52
        $region22: #{tpu_custom_call.1} parent=19 // pred_check_branch
          %108 = sbr.rel (%p106) target = $region24
        $region23: #{tpu_custom_call.1} parent=19 // pred_region
          %p109 = scmp.lt.s32.totalorder %s11, 3
          %s110 = scalar_select %p109, %s11, 3
          %s111 = smul.addr %s110, 4
          %s112 = smul.addr %s111, 4
          %s113 = scalar_lea.vmem %s1, %s112
        $region24: #{tpu_custom_call.1} parent=19 // pred_fallthru
          _
      $region20: #{tpu_custom_call.1} parent=5 // pred_fallthru
        _
      %p114 = scmp.le.s32.totalorder 1, %s11
      %p115 = scmp.lt.s32.totalorder %s11, 5
      %p116 = pnand %p114, %p115
      %p117 = pneg %p116
      // Predicated region
      $region25: #{tpu_custom_call.1} parent=5 // pred_check
        _
      $region26: #{tpu_custom_call.1} parent=5 // pred_check_branch
        %119 = sbr.rel (%p116) target = $region28
      $region27: #{tpu_custom_call.1} parent=5 // pred_region
        %s120 = ssub.s32 %s11, 1
        %p121 = pneg %p32
        %p122 = pneg %p29
        %p123 = scmp.lt.s32.totalorder %s16, 3
        %s124 = scalar_select %p123, %s16, 3
        %s125 = smul.addr %s124, 4
        %s126 = smul.addr %s125, 4
        %s127 = scalar_lea.vmem %s1, %s126
        %p128 = pneg %p58
        %p129 = pneg %p55
        %p130 = pneg %p84
        %p131 = pneg %p81
        %s132 = sand.u32 %s71, 1
        %s133 = scalar_lea.sflag [#allocation3], %s132
        %s134 = sand.u32 %s71, 1
        %s135 = smul.addr %s134, 128
        %s136 = scalar_lea.vmem [#allocation2], %s135
        %p137 = scmp.lt.s32.totalorder %s16, 3
        %s138 = scalar_select %p137, %s16, 3
        %s139 = smul.addr %s138, 4
        %s140 = smul.addr %s139, 4
        %s141 = scalar_lea.vmem %s1, %s140
        %v143 = vld [vmem:[%s0] sm:$0xf]
        %v144 = vld [vmem:[%s0 + $0x4] sm:$0xf]
        %v145 = vld [vmem:[%s0 + $0x8] sm:$0xf]
        %v146 = vld [vmem:[%s0 + $0xc] sm:$0xf]
        %v147 = vld [vmem:[%s0 + $0x10] sm:$0xf]
        %v148 = vld [vmem:[%s0 + $0x14] sm:$0xf]
        %v149 = vld [vmem:[%s0 + $0x18] sm:$0xf]
        %v150 = vld [vmem:[%s0 + $0x1c] sm:$0xf]
        %v151 = vld [vmem:[%s0 + $0x20] sm:$0xf]
        %v152 = vld [vmem:[%s0 + $0x24] sm:$0xf]
        %v153 = vld [vmem:[%s0 + $0x28] sm:$0xf]
        %v154 = vld [vmem:[%s0 + $0x2c] sm:$0xf]
        %v155 = vld [vmem:[%s0 + $0x30] sm:$0xf]
        %v156 = vld [vmem:[%s0 + $0x34] sm:$0xf]
        %v157 = vld [vmem:[%s0 + $0x38] sm:$0xf]
        %v158 = vld [vmem:[%s0 + $0x3c] sm:$0xf]
        %v159 = vld [vmem:[%s0 + $0x40] sm:$0xf]
        %v160 = vld [vmem:[%s0 + $0x44] sm:$0xf]
        %v161 = vld [vmem:[%s0 + $0x48] sm:$0xf]
        %v162 = vld [vmem:[%s0 + $0x4c] sm:$0xf]
        %v163 = vld [vmem:[%s0 + $0x50] sm:$0xf]
        %v164 = vld [vmem:[%s0 + $0x54] sm:$0xf]
        %v165 = vld [vmem:[%s0 + $0x58] sm:$0xf]
        %v166 = vld [vmem:[%s0 + $0x5c] sm:$0xf]
        %v167 = vld [vmem:[%s0 + $0x60] sm:$0xf]
        %v168 = vld [vmem:[%s0 + $0x64] sm:$0xf]
        %v169 = vld [vmem:[%s0 + $0x68] sm:$0xf]
        %v170 = vld [vmem:[%s0 + $0x6c] sm:$0xf]
        %v171 = vld [vmem:[%s0 + $0x70] sm:$0xf]
        %v172 = vld [vmem:[%s0 + $0x74] sm:$0xf]
        %v173 = vld [vmem:[%s0 + $0x78] sm:$0xf]
        %v174 = vld [vmem:[%s0 + $0x7c] sm:$0xf]
        %v175 = vld [vmem:[%s141] sm:$0xf]
        %v176 = vld [vmem:[%s141 + $0x4] sm:$0xf]
        %v177 = vld [vmem:[%s141 + $0x8] sm:$0xf]
        %v178 = vld [vmem:[%s141 + $0xc] sm:$0xf]
        %v211 = vunpack.c.l.b16 %v143
        %v212 = vunpack.c.l.b16 %v144
        %v213 = vunpack.c.l.b16 %v145
        %v214 = vunpack.c.l.b16 %v146
        %v215 = vunpack.c.l.b16 %v147
        %v216 = vunpack.c.l.b16 %v148
        %v217 = vunpack.c.l.b16 %v149
        %v218 = vunpack.c.l.b16 %v150
        %v219 = vunpack.c.l.b16 %v151
        %v220 = vunpack.c.l.b16 %v152
        %v221 = vunpack.c.l.b16 %v153
        %v222 = vunpack.c.l.b16 %v154
        %v223 = vunpack.c.l.b16 %v155
        %v224 = vunpack.c.l.b16 %v156
        %v225 = vunpack.c.l.b16 %v157
        %v226 = vunpack.c.l.b16 %v158
        %v227 = vunpack.c.l.b16 %v159
        %v228 = vunpack.c.l.b16 %v160
        %v229 = vunpack.c.l.b16 %v161
        %v230 = vunpack.c.l.b16 %v162
        %v231 = vunpack.c.l.b16 %v163
        %v232 = vunpack.c.l.b16 %v164
        %v233 = vunpack.c.l.b16 %v165
        %v234 = vunpack.c.l.b16 %v166
        %v235 = vunpack.c.l.b16 %v167
        %v236 = vunpack.c.l.b16 %v168
        %v237 = vunpack.c.l.b16 %v169
        %v238 = vunpack.c.l.b16 %v170
        %v239 = vunpack.c.l.b16 %v171
        %v240 = vunpack.c.l.b16 %v172
        %v241 = vunpack.c.l.b16 %v173
        %v242 = vunpack.c.l.b16 %v174
        %v243 = vpack.c.b16 %v212, %v211
        %v244 = vpack.c.b16 %v214, %v213
        %v245 = vpack.c.b16 %v216, %v215
        %v246 = vpack.c.b16 %v218, %v217
        %v247 = vpack.c.b16 %v220, %v219
        %v248 = vpack.c.b16 %v222, %v221
        %v249 = vpack.c.b16 %v224, %v223
        %v250 = vpack.c.b16 %v226, %v225
        %v251 = vpack.c.b16 %v228, %v227
        %v252 = vpack.c.b16 %v230, %v229
        %v253 = vpack.c.b16 %v232, %v231
        %v254 = vpack.c.b16 %v234, %v233
        %v255 = vpack.c.b16 %v236, %v235
        %v256 = vpack.c.b16 %v238, %v237
        %v257 = vpack.c.b16 %v240, %v239
        %v258 = vpack.c.b16 %v242, %v241
        %v263 = vunpack.c.l.b16 %v175
        %v264 = vunpack.c.l.b16 %v176
        %v265 = vunpack.c.l.b16 %v177
        %v266 = vunpack.c.l.b16 %v178
        %v267 = vpack.c.b16 %v264, %v263
        %v268 = vpack.c.b16 %v266, %v265
        %vm271 = vcmask 261120
        %v273 = vsel %vm271, %v243, 0
        %v276 = vsel %vm271, %v244, 0
        %v279 = vsel %vm271, %v245, 0
        %v282 = vsel %vm271, %v246, 0
        %v285 = vsel %vm271, %v247, 0
        %v288 = vsel %vm271, %v248, 0
        %v291 = vsel %vm271, %v249, 0
        %v294 = vsel %vm271, %v250, 0
        %v297 = vsel %vm271, %v251, 0
        %v300 = vsel %vm271, %v252, 0
        %v303 = vsel %vm271, %v253, 0
        %v306 = vsel %vm271, %v254, 0
        %v309 = vsel %vm271, %v255, 0
        %v312 = vsel %vm271, %v256, 0
        %v315 = vsel %vm271, %v257, 0
        %v318 = vsel %vm271, %v258, 0
        %320 = vmatprep.subr.bf16.mxu0 0
        %321 = vmatpush1.bf16.msra.mxu0 0
        %322 = vmatprep.subr.bf16.mxu0 0
        %323 = vmatpush1.bf16.msra.mxu0 0
        %324 = vmatprep.subr.bf16.mxu0 0
        %325 = vmatpush1.bf16.msra.mxu0 0
        %326 = vmatprep.subr.bf16.mxu0 0
        %327 = vmatpush1.bf16.msra.mxu0 0
        %328 = vmatprep.subr.bf16.mxu0 0
        %329 = vmatpush1.bf16.msra.mxu0 0
        %330 = vmatprep.subr.bf16.mxu0 0
        %331 = vmatpush1.bf16.msra.mxu0 0
        %332 = vmatprep.subr.bf16.mxu0 0
        %333 = vmatpush1.bf16.msra.mxu0 %v268
        %334 = vmatprep.subr.bf16.mxu0 0
        %335 = vmatpush1.bf16.msra.mxu0 %v267
        %336 = vmatprep.subr.bf16.mxu0 0
        %337 = vmatpush2.bf16.msra.mxu0 0
        %338 = vmatprep.subr.bf16.mxu0 0
        %339 = vmatpush2.bf16.msra.mxu0 0
        %340 = vmatprep.subr.bf16.mxu0 0
        %341 = vmatpush2.bf16.msra.mxu0 0
        %342 = vmatprep.subr.bf16.mxu0 0
        %343 = vmatpush2.bf16.msra.mxu0 0
        %344 = vmatprep.subr.bf16.mxu0 0
        %345 = vmatpush2.bf16.msra.mxu0 0
        %346 = vmatprep.subr.bf16.mxu0 0
        %347 = vmatpush2.bf16.msra.mxu0 0
        %348 = vmatprep.subr.bf16.mxu0 0
        %349 = vmatpush2.bf16.msra.mxu0 0
        %350 = vmatprep.subr.bf16.mxu0 0
        %351 = vmatpush2.bf16.msra.mxu0 0
        %352 = vmatprep.mubr.bf16.mxu0 0
        %353 = vmatmul.mubr.bf16.gmra.mxu0 %v273
        %v354 = vpop.f32.mrf.mxu0
        %v355 = vadd.f32 0.0, %v354
        %v356 = vpop.f32.mrf.mxu0
        %v357 = vpop.f32.mrf.mxu0
        %v358 = vadd.f32 0.0, %v357
        %v359 = vpop.f32.mrf.mxu0
        %360 = vmatprep.mubr.bf16.mxu0 0
        %361 = vmatmul.mubr.bf16.gmra.mxu0 %v276
        %v362 = vpop.f32.mrf.mxu0
        %v363 = vadd.f32 0.0, %v362
        %v364 = vpop.f32.mrf.mxu0
        %v365 = vpop.f32.mrf.mxu0
        %v366 = vadd.f32 0.0, %v365
        %v367 = vpop.f32.mrf.mxu0
        %368 = vmatprep.mubr.bf16.mxu0 0
        %369 = vmatmul.mubr.bf16.gmra.mxu0 %v279
        %v370 = vpop.f32.mrf.mxu0
        %v371 = vadd.f32 0.0, %v370
        %v372 = vpop.f32.mrf.mxu0
        %v373 = vpop.f32.mrf.mxu0
        %v374 = vadd.f32 0.0, %v373
        %v375 = vpop.f32.mrf.mxu0
        %376 = vmatprep.mubr.bf16.mxu0 0
        %377 = vmatmul.mubr.bf16.gmra.mxu0 %v282
        %v378 = vpop.f32.mrf.mxu0
        %v379 = vadd.f32 0.0, %v378
        %v380 = vpop.f32.mrf.mxu0
        %v381 = vpop.f32.mrf.mxu0
        %v382 = vadd.f32 0.0, %v381
        %v383 = vpop.f32.mrf.mxu0
        %384 = vmatprep.mubr.bf16.mxu0 0
        %385 = vmatmul.mubr.bf16.gmra.mxu0 %v285
        %v386 = vpop.f32.mrf.mxu0
        %v387 = vadd.f32 0.0, %v386
        %v388 = vpop.f32.mrf.mxu0
        %v389 = vpop.f32.mrf.mxu0
        %v390 = vadd.f32 0.0, %v389
        %v391 = vpop.f32.mrf.mxu0
        %392 = vmatprep.mubr.bf16.mxu0 0
        %393 = vmatmul.mubr.bf16.gmra.mxu0 %v288
        %v394 = vpop.f32.mrf.mxu0
        %v395 = vadd.f32 0.0, %v394
        %v396 = vpop.f32.mrf.mxu0
        %v397 = vpop.f32.mrf.mxu0
        %v398 = vadd.f32 0.0, %v397
        %v399 = vpop.f32.mrf.mxu0
        %400 = vmatprep.mubr.bf16.mxu0 0
        %401 = vmatmul.mubr.bf16.gmra.mxu0 %v291
        %v402 = vpop.f32.mrf.mxu0
        %v403 = vadd.f32 0.0, %v402
        %v404 = vpop.f32.mrf.mxu0
        %v405 = vpop.f32.mrf.mxu0
        %v406 = vadd.f32 0.0, %v405
        %v407 = vpop.f32.mrf.mxu0
        %408 = vmatprep.mubr.bf16.mxu0 0
        %409 = vmatmul.mubr.bf16.gmra.mxu0 %v294
        %v410 = vpop.f32.mrf.mxu0
        %v411 = vadd.f32 0.0, %v410
        %v412 = vpop.f32.mrf.mxu0
        %v413 = vpop.f32.mrf.mxu0
        %v414 = vadd.f32 0.0, %v413
        %v415 = vpop.f32.mrf.mxu0
        %416 = vmatprep.mubr.bf16.mxu0 0
        %417 = vmatmul.mubr.bf16.gmra.mxu0 %v297
        %v418 = vpop.f32.mrf.mxu0
        %v419 = vadd.f32 0.0, %v418
        %v420 = vpop.f32.mrf.mxu0
        %v421 = vpop.f32.mrf.mxu0
        %v422 = vadd.f32 0.0, %v421
        %v423 = vpop.f32.mrf.mxu0
        %424 = vmatprep.mubr.bf16.mxu0 0
        %425 = vmatmul.mubr.bf16.gmra.mxu0 %v300
        %v426 = vpop.f32.mrf.mxu0
        %v427 = vadd.f32 0.0, %v426
        %v428 = vpop.f32.mrf.mxu0
        %v429 = vpop.f32.mrf.mxu0
        %v430 = vadd.f32 0.0, %v429
        %v431 = vpop.f32.mrf.mxu0
        %432 = vmatprep.mubr.bf16.mxu0 0
        %433 = vmatmul.mubr.bf16.gmra.mxu0 %v303
        %v434 = vpop.f32.mrf.mxu0
        %v435 = vadd.f32 0.0, %v434
        %v436 = vpop.f32.mrf.mxu0
        %v437 = vpop.f32.mrf.mxu0
        %v438 = vadd.f32 0.0, %v437
        %v439 = vpop.f32.mrf.mxu0
        %440 = vmatprep.mubr.bf16.mxu0 0
        %441 = vmatmul.mubr.bf16.gmra.mxu0 %v306
        %v442 = vpop.f32.mrf.mxu0
        %v443 = vadd.f32 0.0, %v442
        %v444 = vpop.f32.mrf.mxu0
        %v445 = vpop.f32.mrf.mxu0
        %v446 = vadd.f32 0.0, %v445
        %v447 = vpop.f32.mrf.mxu0
        %448 = vmatprep.mubr.bf16.mxu0 0
        %449 = vmatmul.mubr.bf16.gmra.mxu0 %v309
        %v450 = vpop.f32.mrf.mxu0
        %v451 = vadd.f32 0.0, %v450
        %v452 = vpop.f32.mrf.mxu0
        %v453 = vpop.f32.mrf.mxu0
        %v454 = vadd.f32 0.0, %v453
        %v455 = vpop.f32.mrf.mxu0
        %456 = vmatprep.mubr.bf16.mxu0 0
        %457 = vmatmul.mubr.bf16.gmra.mxu0 %v312
        %v458 = vpop.f32.mrf.mxu0
        %v459 = vadd.f32 0.0, %v458
        %v460 = vpop.f32.mrf.mxu0
        %v461 = vpop.f32.mrf.mxu0
        %v462 = vadd.f32 0.0, %v461
        %v463 = vpop.f32.mrf.mxu0
        %464 = vmatprep.mubr.bf16.mxu0 0
        %465 = vmatmul.mubr.bf16.gmra.mxu0 %v315
        %v466 = vpop.f32.mrf.mxu0
        %v467 = vadd.f32 0.0, %v466
        %v468 = vpop.f32.mrf.mxu0
        %v469 = vpop.f32.mrf.mxu0
        %v470 = vadd.f32 0.0, %v469
        %v471 = vpop.f32.mrf.mxu0
        %472 = vmatprep.mubr.bf16.mxu0 0
        %473 = vmatmul.mubr.bf16.gmra.mxu0 %v318
        %v474 = vpop.f32.mrf.mxu0
        %v475 = vadd.f32 0.0, %v474
        %v476 = vpop.f32.mrf.mxu0
        %v477 = vpop.f32.mrf.mxu0
        %v478 = vadd.f32 0.0, %v477
        %v479 = vpop.f32.mrf.mxu0
        %480 = vdwg.mxu0
        %v481 = vpack.c.bf16 %v358, %v355
        %v482 = vpack.c.bf16 %v366, %v363
        %v483 = vpack.c.bf16 %v374, %v371
        %v484 = vpack.c.bf16 %v382, %v379
        %v485 = vpack.c.bf16 %v390, %v387
        %v486 = vpack.c.bf16 %v398, %v395
        %v487 = vpack.c.bf16 %v406, %v403
        %v488 = vpack.c.bf16 %v414, %v411
        %v489 = vpack.c.bf16 %v422, %v419
        %v490 = vpack.c.bf16 %v430, %v427
        %v491 = vpack.c.bf16 %v438, %v435
        %v492 = vpack.c.bf16 %v446, %v443
        %v493 = vpack.c.bf16 %v454, %v451
        %v494 = vpack.c.bf16 %v462, %v459
        %v495 = vpack.c.bf16 %v470, %v467
        %v496 = vpack.c.bf16 %v478, %v475
        %v513 = vunpack.c.l.b16 %v481
        %v514 = vunpack.c.h.b16 %v481
        %v515 = vunpack.c.l.b16 %v482
        %v516 = vunpack.c.h.b16 %v482
        %v517 = vunpack.c.l.b16 %v483
        %v518 = vunpack.c.h.b16 %v483
        %v519 = vunpack.c.l.b16 %v484
        %v520 = vunpack.c.h.b16 %v484
        %v521 = vunpack.c.l.b16 %v485
        %v522 = vunpack.c.h.b16 %v485
        %v523 = vunpack.c.l.b16 %v486
        %v524 = vunpack.c.h.b16 %v486
        %v525 = vunpack.c.l.b16 %v487
        %v526 = vunpack.c.h.b16 %v487
        %v527 = vunpack.c.l.b16 %v488
        %v528 = vunpack.c.h.b16 %v488
        %v529 = vunpack.c.l.b16 %v489
        %v530 = vunpack.c.h.b16 %v489
        %v531 = vunpack.c.l.b16 %v490
        %v532 = vunpack.c.h.b16 %v490
        %v533 = vunpack.c.l.b16 %v491
        %v534 = vunpack.c.h.b16 %v491
        %v535 = vunpack.c.l.b16 %v492
        %v536 = vunpack.c.h.b16 %v492
        %v537 = vunpack.c.l.b16 %v493
        %v538 = vunpack.c.h.b16 %v493
        %v539 = vunpack.c.l.b16 %v494
        %v540 = vunpack.c.h.b16 %v494
        %v541 = vunpack.c.l.b16 %v495
        %v542 = vunpack.c.h.b16 %v495
        %v543 = vunpack.c.l.b16 %v496
        %v544 = vunpack.c.h.b16 %v496
        %v545 = vpack.c.b16 %v513, %v513
        %v546 = vpack.c.b16 %v514, %v514
        %v547 = vpack.c.b16 %v515, %v515
        %v548 = vpack.c.b16 %v516, %v516
        %v549 = vpack.c.b16 %v517, %v517
        %v550 = vpack.c.b16 %v518, %v518
        %v551 = vpack.c.b16 %v519, %v519
        %v552 = vpack.c.b16 %v520, %v520
        %v553 = vpack.c.b16 %v521, %v521
        %v554 = vpack.c.b16 %v522, %v522
        %v555 = vpack.c.b16 %v523, %v523
        %v556 = vpack.c.b16 %v524, %v524
        %v557 = vpack.c.b16 %v525, %v525
        %v558 = vpack.c.b16 %v526, %v526
        %v559 = vpack.c.b16 %v527, %v527
        %v560 = vpack.c.b16 %v528, %v528
        %v561 = vpack.c.b16 %v529, %v529
        %v562 = vpack.c.b16 %v530, %v530
        %v563 = vpack.c.b16 %v531, %v531
        %v564 = vpack.c.b16 %v532, %v532
        %v565 = vpack.c.b16 %v533, %v533
        %v566 = vpack.c.b16 %v534, %v534
        %v567 = vpack.c.b16 %v535, %v535
        %v568 = vpack.c.b16 %v536, %v536
        %v569 = vpack.c.b16 %v537, %v537
        %v570 = vpack.c.b16 %v538, %v538
        %v571 = vpack.c.b16 %v539, %v539
        %v572 = vpack.c.b16 %v540, %v540
        %v573 = vpack.c.b16 %v541, %v541
        %v574 = vpack.c.b16 %v542, %v542
        %v575 = vpack.c.b16 %v543, %v543
        %v576 = vpack.c.b16 %v544, %v544
        %609 = vst [vmem:[%s136] sm:$0xf] %v545
        %610 = vst [vmem:[%s136 + $0x4] sm:$0xf] %v546
        %611 = vst [vmem:[%s136 + $0x8] sm:$0xf] %v547
        %612 = vst [vmem:[%s136 + $0xc] sm:$0xf] %v548
        %613 = vst [vmem:[%s136 + $0x10] sm:$0xf] %v549
        %614 = vst [vmem:[%s136 + $0x14] sm:$0xf] %v550
        %615 = vst [vmem:[%s136 + $0x18] sm:$0xf] %v551
        %616 = vst [vmem:[%s136 + $0x1c] sm:$0xf] %v552
        %617 = vst [vmem:[%s136 + $0x20] sm:$0xf] %v553
        %618 = vst [vmem:[%s136 + $0x24] sm:$0xf] %v554
        %619 = vst [vmem:[%s136 + $0x28] sm:$0xf] %v555
        %620 = vst [vmem:[%s136 + $0x2c] sm:$0xf] %v556
        %621 = vst [vmem:[%s136 + $0x30] sm:$0xf] %v557
        %622 = vst [vmem:[%s136 + $0x34] sm:$0xf] %v558
        %623 = vst [vmem:[%s136 + $0x38] sm:$0xf] %v559
        %624 = vst [vmem:[%s136 + $0x3c] sm:$0xf] %v560
        %625 = vst [vmem:[%s136 + $0x40] sm:$0xf] %v561
        %626 = vst [vmem:[%s136 + $0x44] sm:$0xf] %v562
        %627 = vst [vmem:[%s136 + $0x48] sm:$0xf] %v563
        %628 = vst [vmem:[%s136 + $0x4c] sm:$0xf] %v564
        %629 = vst [vmem:[%s136 + $0x50] sm:$0xf] %v565
        %630 = vst [vmem:[%s136 + $0x54] sm:$0xf] %v566
        %631 = vst [vmem:[%s136 + $0x58] sm:$0xf] %v567
        %632 = vst [vmem:[%s136 + $0x5c] sm:$0xf] %v568
        %633 = vst [vmem:[%s136 + $0x60] sm:$0xf] %v569
        %634 = vst [vmem:[%s136 + $0x64] sm:$0xf] %v570
        %635 = vst [vmem:[%s136 + $0x68] sm:$0xf] %v571
        %636 = vst [vmem:[%s136 + $0x6c] sm:$0xf] %v572
        %637 = vst [vmem:[%s136 + $0x70] sm:$0xf] %v573
        %638 = vst [vmem:[%s136 + $0x74] sm:$0xf] %v574
        %639 = vst [vmem:[%s136 + $0x78] sm:$0xf] %v575
        %640 = vst [vmem:[%s136 + $0x7c] sm:$0xf] %v576
        %s641 = sand.u32 %s71, 1
        %s642 = scalar_lea.sflag [#allocation3], %s641
        %s643 = sand.u32 %s71, 1
        %s644 = smul.addr %s643, 128
        %s645 = scalar_lea.vmem [#allocation2], %s644
        // Predicated region
        $region29: #{tpu_custom_call.1} parent=27 // pred_check
          %p646 = pneg %p81
        $region30: #{tpu_custom_call.1} parent=27 // pred_check_branch
          %648 = sbr.rel (%p646) target = $region32
        $region31: #{tpu_custom_call.1} parent=27 // pred_region
          %s650 = ssub.s32 2048, 2048
          %651 = vsyncadd %s642, %s650
          %s652 = smul.addr %s16, 32
          %s653 = smul.addr %s652, 64
          %s654 = scalar_lea.hbm %s2, %s653
          %s655 = sshll.u32 %s645, 4
          %s656 = int_to_ptr.vmem [resolvable:$true] %s655
          %661 = dma.vmem_to_hbm [thread:$0]  %s656, 2048, %s654, %s642, 64, 64, 4
        $region32: #{tpu_custom_call.1} parent=27 // pred_fallthru
          _
      $region28: #{tpu_custom_call.1} parent=5 // pred_fallthru
        _
      %p662 = scmp.le.s32.totalorder 2, %s11
      // Predicated region
      $region33: #{tpu_custom_call.1} parent=5 // pred_check
        %p663 = pneg %p662
      $region34: #{tpu_custom_call.1} parent=5 // pred_check_branch
        %665 = sbr.rel (%p663) target = $region36
      $region35: #{tpu_custom_call.1} parent=5 // pred_region
        %s666 = ssub.s32 %s11, 2
        // Predicated region
        $region37: #{tpu_custom_call.1} parent=35 // pred_check
          %p667 = pneg %p87
        $region38: #{tpu_custom_call.1} parent=35 // pred_check_branch
          %669 = sbr.rel (%p667) target = $region40
        $region39: #{tpu_custom_call.1} parent=35 // pred_region
          %s670 = sand.u32 %s72, 1
          %s671 = scalar_lea.sflag [#allocation3], %s670
          %s672 = sand.u32 %s72, 1
          %s673 = smul.addr %s672, 128
          %s674 = scalar_lea.vmem [#allocation2], %s673
          %675 = dma.done %s671, 2048
        $region40: #{tpu_custom_call.1} parent=35 // pred_fallthru
          _
      $region36: #{tpu_custom_call.1} parent=5 // pred_fallthru
        _
    $region6: #{tpu_custom_call.1} parent=1 // loop_footer
      %s15 = sadd.s32 1, %s11
    $region7: #{tpu_custom_call.1} parent=1 // loop_footer_branch
      %10 = sbr.rel target = $region3
    $region8: #{tpu_custom_call.1} parent=1 // loop_exit
      _
    %676 = vsyncpa [#allocation3], 1
    %s677 = scalar_lea.sflag [#allocation3], 1
    %678 = vsyncpa %s677, 1

</llo_original>
